<compile_context>
chip_gen: v7x
topology: tpu7x:2x2x1
jax: 0.10.0
libtpu: 0.0.40
codegen_flags: <defaults>
</compile_context>

<pallas_src>
import functools
import math

import jax
import jax.numpy as jnp
from jax import lax
from jax.experimental import pallas as pl
from jax.experimental.pallas import tpu as pltpu


def _grad_kernel(x_ref, out_ref, *, penalty, W, Hp, Wp, inv_ndx, inv_ndy):
    """Process one (RB, Wp) row-block; accumulate weighted per-lane sums.

    Each packed row holds r = Wp // W consecutive original image rows along
    the lane axis; Hp = H // r packed rows form one original (H, W) slice.
    Blocks always contain whole slices (RB % Hp == 0).
    """
    i = pl.program_id(1)

    @pl.when(i == 0)
    def _():
        out_ref[...] = jnp.zeros_like(out_ref)

    x = x_ref[...].astype(jnp.float32)                      # (RB, Wp)
    RB = x.shape[0]

    col = lax.broadcasted_iota(jnp.int32, (1, Wp), 1)       # lane index
    row = lax.broadcasted_iota(jnp.int32, (RB, 1), 0)       # row index in block

    # ---- dx: finite difference along original W (within a packed row) ----
    x_c1 = pltpu.roll(x, shift=Wp - 1, axis=1)              # x[:, (c+1) % Wp]
    dx = x_c1 - x
    pdx = dx * dx if penalty == 'l2' else jnp.abs(dx)
    # last column of every original row wraps into the next row -> weight 0.
    wdx = jnp.where((col % W) != (W - 1),
                    jnp.float32(inv_ndx), jnp.float32(0.0))  # (1, Wp)
    t = pdx * wdx

    # ---- dy: finite difference along original H ---------------------------
    # The H-successor of a pixel sits either W lanes to the right (same packed
    # row) or in the first W lanes of the next packed row.
    x_r1 = pltpu.roll(x, shift=RB - 1, axis=0) if Hp > 1 else x  # next block row
    if Wp != W:
        sel = jnp.where(col < W, x_r1, x)
        dysucc = pltpu.roll(sel, shift=Wp - W, axis=1)
    else:
        dysucc = x_r1
    dy = dysucc - x
    pdy = dy * dy if penalty == 'l2' else jnp.abs(dy)
    # invalid: seam columns on the last packed row of a slice (would cross
    # into the next slice / wrap around the block) -> weight 0.
    invalid = jnp.logical_and((row % Hp) == (Hp - 1), col >= (Wp - W))
    wdy = jnp.where(invalid, jnp.float32(0.0), jnp.float32(inv_ndy))
    t = t + pdy * wdy

    # per-lane partial sums; cheap row-reduce hides under the input DMA.
    out_ref[...] += jnp.sum(t, axis=0, keepdims=True).reshape(1, 1, Wp)


@functools.partial(jax.jit, static_argnames=("penalty", "loss_mult"))
def grad_loss(y_pred, y_true=None, *, penalty='l1', loss_mult=None):
    """Equivalent of Grad(penalty, loss_mult).forward(y_pred, y_true).

    y_pred: (N, C, H, W) NCHW, like the PyTorch module. y_true is unused by
    the reference implementation.
    """
    del y_true  # unused by the reference loss
    N, C, H, W = y_pred.shape
    B = N * C
    x = y_pred.reshape(B, H, W)

    # Lane packing: fold r original rows into the lane axis (free reshape).
    if W >= 128:
        r = 1
    else:
        r = 1
        for d in range(1, min(H, 128 // W) + 1):
            if H % d == 0:
                r = d
    Hp, Wp = H // r, W * r

    # Row blocking: ~4 MiB blocks, whole slices per block, 2-core split.
    Rtot = B * Hp
    lcm_v = (Hp * 8) // math.gcd(Hp, 8)           # RB % Hp == 0 and RB % 8 == 0
    wp_pad = -(-Wp // 128) * 128
    target_rows = max(1, (4 * 1024 * 1024) // (wp_pad * 4))
    RB = max(lcm_v, (target_rows // lcm_v) * lcm_v)
    per_core_rows = -(-Rtot // 2)
    RB = min(RB, -(-per_core_rows // lcm_v) * lcm_v)
    nb_half = -(-Rtot // (2 * RB))                # inner grid length per core
    Rtot_pad = 2 * nb_half * RB
    B_pad = Rtot_pad // Hp
    # TODO(synk): slices larger than VMEM (huge H*W) would need halo tiling.

    if B_pad > B:                                 # zero slices contribute 0
        x = jnp.concatenate([x, jnp.zeros((B_pad - B, H, W), x.dtype)], axis=0)
    x_rows = x.reshape(Rtot_pad, Wp)              # contiguous => free reshape

    n_dx = B * H * (W - 1)
    n_dy = B * (H - 1) * W
    inv_ndx = (1.0 / n_dx) if n_dx > 0 else 0.0
    inv_ndy = (1.0 / n_dy) if n_dy > 0 else 0.0

    kernel = functools.partial(_grad_kernel, penalty=penalty, W=W,
                               Hp=Hp, Wp=Wp, inv_ndx=inv_ndx, inv_ndy=inv_ndy)

    partials = pl.pallas_call(
        kernel,
        out_shape=jax.ShapeDtypeStruct((2, 1, Wp), jnp.float32),
        grid=(2, nb_half),
        in_specs=[pl.BlockSpec((RB, Wp), lambda p, i: (p * nb_half + i, 0))],
        out_specs=pl.BlockSpec((1, 1, Wp), lambda p, i: (p, 0, 0)),
        compiler_params=pltpu.CompilerParams(
            dimension_semantics=("parallel", "arbitrary"),
            vmem_limit_bytes=32 * 1024 * 1024),
    )(x_rows)

    d = jnp.sum(partials)                         # = mean(dx) + mean(dy)
    grad = d / 2.0
    if loss_mult is not None:
        grad = grad * loss_mult
    return grad


def _grad_ref(y_pred, penalty='l1', loss_mult=None):
    """Pure-JAX reference mirroring the PyTorch module."""
    dy = jnp.abs(y_pred[:, :, 1:, :] - y_pred[:, :, :-1, :])
    dx = jnp.abs(y_pred[:, :, :, 1:] - y_pred[:, :, :, :-1])
    if penalty == 'l2':
        dy = dy * dy
        dx = dx * dx
    d = jnp.mean(dx) + jnp.mean(dy)
    grad = d / 2.0
    if loss_mult is not None:
        grad = grad * loss_mult
    return grad


if __name__ == "__main__":
    key = jax.random.PRNGKey(0)
    keys = jax.random.split(key, 4)

    cases = [
        ((2, 4, 16, 16), 'l1', None),    # primary test shape
        ((2, 4, 16, 16), 'l2', 0.5),
        ((3, 2, 12, 20), 'l1', 2.0),     # exercises batch padding, Wp=120
        ((1, 2, 24, 160), 'l2', None),   # W >= 128 -> no lane packing
    ]
    for (shape, pen, lm), kk in zip(cases, keys):
        y_pred = jax.random.normal(kk, shape, dtype=jnp.float32)
        y_true = jnp.zeros_like(y_pred)  # unused by the loss
        out = jax.block_until_ready(
            grad_loss(y_pred, y_true, penalty=pen, loss_mult=lm))
        ref = _grad_ref(y_pred, penalty=pen, loss_mult=lm)
        assert jnp.allclose(out, ref, rtol=1e-5, atol=1e-6), (shape, pen, out, ref)

    print("KERNEL_OK")
</pallas_src>

<mosaic_0001>
module attributes {stable_mosaic.version = 11 : i64} {
  func.func @_grad_kernel(%arg0: i32, %arg1: i32, %arg2: memref<8x128xf32, #tpu.memory_space<vmem>>, %arg3: memref<1x1x128xf32, #tpu.memory_space<vmem>>) attributes {dimension_semantics = [#tpu.dimension_semantics<parallel>, #tpu.dimension_semantics<arbitrary>], iteration_bounds = array<i64: 2, 1>, scalar_prefetch = 0 : i64, scratch_operands = 0 : i64, tpu.core_type = #tpu.core_type<tc>, window_params = [{transform_indices = @transform_0, window_bounds = array<i64: 8, 128>}, {transform_indices = @transform_1, window_bounds = array<i64: 1, 1, 128>}]} {
    %c0_i32 = arith.constant 0 : i32
    %0 = arith.cmpi eq, %arg1, %c0_i32 : i32
    %1 = arith.extui %0 : i1 to i32
    %c0_i32_0 = arith.constant 0 : i32
    %2 = arith.cmpi ne, %1, %c0_i32_0 : i32
    scf.if %2 {
      %cst_24 = arith.constant 0.000000e+00 : f32
      %75 = vector.broadcast %cst_24 : f32 to vector<1x1x128xf32>
      %c0_25 = arith.constant 0 : index
      %c0_26 = arith.constant 0 : index
      %c0_27 = arith.constant 0 : index
      %76 = vector.load %arg3[%c0_25, %c0_26, %c0_27] : memref<1x1x128xf32, #tpu.memory_space<vmem>>, vector<1x1x128xf32>
      tpu.vector_store %arg3[%c0_25, %c0_26, %c0_27], %75 {strides = array<i32>} : memref<1x1x128xf32, #tpu.memory_space<vmem>>, vector<1x1x128xf32>,
    } else {
    }
    %c0 = arith.constant 0 : index
    %c0_1 = arith.constant 0 : index
    %3 = vector.load %arg2[%c0, %c0_1] : memref<8x128xf32, #tpu.memory_space<vmem>>, vector<8x128xf32>
    %4 = tpu.iota {dimensions = array<i32: 1>} : vector<1x128xi32>
    %5 = tpu.iota {dimensions = array<i32: 0>} : vector<8x1xi32>
    %c127_i32 = arith.constant 127 : i32
    %6 = tpu.dynamic_rotate %3 by %c127_i32 dim 1 : vector<8x128xf32>, i32 -> vector<8x128xf32>
    %7 = arith.subf %6, %3 : vector<8x128xf32>
    %8 = math.absf %7 : vector<8x128xf32>
    %c16_i32 = arith.constant 16 : i32
    %c0_i32_2 = arith.constant 0 : i32
    %9 = arith.cmpi eq, %c16_i32, %c0_i32_2 : i32
    %c1_i32 = arith.constant 1 : i32
    %10 = arith.select %9, %c1_i32, %c16_i32 : i32
    %11 = vector.broadcast %10 : i32 to vector<1x128xi32>
    %12 = arith.remsi %4, %11 : vector<1x128xi32>
    %c0_i32_3 = arith.constant 0 : i32
    %13 = vector.broadcast %c0_i32_3 : i32 to vector<1x128xi32>
    %14 = arith.cmpi ne, %12, %13 : vector<1x128xi32>
    %c0_i32_4 = arith.constant 0 : i32
    %15 = vector.broadcast %c0_i32_4 : i32 to vector<1x128xi32>
    %16 = arith.cmpi slt, %12, %15 : vector<1x128xi32>
    %c0_i32_5 = arith.constant 0 : i32
    %17 = arith.cmpi slt, %10, %c0_i32_5 : i32
    %18 = vector.broadcast %17 : i1 to vector<1x128xi1>
    %19 = vector.broadcast %18 : vector<1x128xi1> to vector<1x128xi1>
    %20 = arith.xori %16, %19 : vector<1x128xi1>
    %21 = arith.andi %20, %14 : vector<1x128xi1>
    %22 = vector.broadcast %10 : i32 to vector<1x128xi32>
    %23 = arith.addi %12, %22 : vector<1x128xi32>
    %24 = arith.select %21, %23, %12 : vector<1x128xi1>, vector<1x128xi32>
    %c15_i32 = arith.constant 15 : i32
    %25 = vector.broadcast %c15_i32 : i32 to vector<1x128xi32>
    %26 = arith.cmpi ne, %24, %25 : vector<1x128xi32>
    %cst = arith.constant 5.2083336E-4 : f32
    %cst_6 = arith.constant 0.000000e+00 : f32
    %27 = vector.broadcast %cst : f32 to vector<1x128xf32>
    %28 = vector.broadcast %cst_6 : f32 to vector<1x128xf32>
    %29 = arith.select %26, %27, %28 : vector<1x128xi1>, vector<1x128xf32>
    %30 = vector.broadcast %29 : vector<1x128xf32> to vector<8x128xf32>
    %31 = arith.mulf %8, %30 : vector<8x128xf32>
    %c7_i32 = arith.constant 7 : i32
    %32 = tpu.dynamic_rotate %3 by %c7_i32 dim 0 : vector<8x128xf32>, i32 -> vector<8x128xf32>
    %c16_i32_7 = arith.constant 16 : i32
    %33 = vector.broadcast %c16_i32_7 : i32 to vector<1x128xi32>
    %34 = arith.cmpi slt, %4, %33 : vector<1x128xi32>
    %35 = vector.shape_cast %34 : vector<1x128xi1> to vector<1x128xi1>
    %36 = vector.broadcast %35 : vector<1x128xi1> to vector<8x128xi1>
    %37 = arith.select %36, %32, %3 : vector<8x128xi1>, vector<8x128xf32>
    %c112_i32 = arith.constant 112 : i32
    %38 = tpu.dynamic_rotate %37 by %c112_i32 dim 1 : vector<8x128xf32>, i32 -> vector<8x128xf32>
    %39 = arith.subf %38, %3 : vector<8x128xf32>
    %40 = math.absf %39 : vector<8x128xf32>
    %c2_i32 = arith.constant 2 : i32
    %c0_i32_8 = arith.constant 0 : i32
    %41 = arith.cmpi eq, %c2_i32, %c0_i32_8 : i32
    %c1_i32_9 = arith.constant 1 : i32
    %42 = arith.select %41, %c1_i32_9, %c2_i32 : i32
    %43 = vector.broadcast %42 : i32 to vector<8x1xi32>
    %44 = arith.remsi %5, %43 : vector<8x1xi32>
    %c0_i32_10 = arith.constant 0 : i32
    %45 = vector.broadcast %c0_i32_10 : i32 to vector<8x1xi32>
    %46 = arith.cmpi ne, %44, %45 : vector<8x1xi32>
    %c0_i32_11 = arith.constant 0 : i32
    %47 = vector.broadcast %c0_i32_11 : i32 to vector<8x1xi32>
    %48 = arith.cmpi slt, %44, %47 : vector<8x1xi32>
    %c0_i32_12 = arith.constant 0 : i32
    %49 = arith.cmpi slt, %42, %c0_i32_12 : i32
    %50 = vector.broadcast %49 : i1 to vector<8x1xi1>
    %51 = vector.broadcast %50 : vector<8x1xi1> to vector<8x1xi1>
    %52 = arith.xori %48, %51 : vector<8x1xi1>
    %53 = arith.andi %52, %46 : vector<8x1xi1>
    %54 = vector.broadcast %42 : i32 to vector<8x1xi32>
    %55 = arith.addi %44, %54 : vector<8x1xi32>
    %56 = arith.select %53, %55, %44 : vector<8x1xi1>, vector<8x1xi32>
    %c1_i32_13 = arith.constant 1 : i32
    %57 = vector.broadcast %c1_i32_13 : i32 to vector<8x1xi32>
    %58 = arith.cmpi eq, %56, %57 : vector<8x1xi32>
    %c112_i32_14 = arith.constant 112 : i32
    %59 = vector.broadcast %c112_i32_14 : i32 to vector<1x128xi32>
    %60 = arith.cmpi sge, %4, %59 : vector<1x128xi32>
    %61 = vector.broadcast %58 : vector<8x1xi1> to vector<8x128xi1>
    %62 = vector.broadcast %60 : vector<1x128xi1> to vector<8x128xi1>
    %63 = arith.andi %61, %62 : vector<8x128xi1>
    %cst_15 = arith.constant 0.000000e+00 : f32
    %cst_16 = arith.constant 5.2083336E-4 : f32
    %64 = vector.broadcast %cst_15 : f32 to vector<8x128xf32>
    %65 = vector.broadcast %cst_16 : f32 to vector<8x128xf32>
    %66 = arith.select %63, %64, %65 : vector<8x128xi1>, vector<8x128xf32>
    %67 = arith.mulf %40, %66 : vector<8x128xf32>
    %68 = arith.addf %31, %67 : vector<8x128xf32>
    %c0_17 = arith.constant 0 : index
    %c0_18 = arith.constant 0 : index
    %c0_19 = arith.constant 0 : index
    %69 = vector.load %arg3[%c0_17, %c0_18, %c0_19] : memref<1x1x128xf32, #tpu.memory_space<vmem>>, vector<1x1x128xf32>
    %cst_20 = arith.constant dense<0.000000e+00> : vector<128xf32>
    %70 = vector.multi_reduction <add>, %68, %cst_20 [0] : vector<8x128xf32> to vector<128xf32>
    %71 = vector.shape_cast %70 : vector<128xf32> to vector<1x128xf32>
    %72 = vector.shape_cast %71 : vector<1x128xf32> to vector<1x1x128xf32>
    %73 = arith.addf %69, %72 : vector<1x1x128xf32>
    %c0_21 = arith.constant 0 : index
    %c0_22 = arith.constant 0 : index
    %c0_23 = arith.constant 0 : index
    %74 = vector.load %arg3[%c0_21, %c0_22, %c0_23] : memref<1x1x128xf32, #tpu.memory_space<vmem>>, vector<1x1x128xf32>
    tpu.vector_store %arg3[%c0_21, %c0_22, %c0_23], %73 {strides = array<i32>} : memref<1x1x128xf32, #tpu.memory_space<vmem>>, vector<1x1x128xf32>,
    return
  }
  func.func @transform_0(%arg0: i32, %arg1: i32) -> (i32, i32) {
    %c1_i32 = arith.constant 1 : i32
    %0 = arith.muli %arg0, %c1_i32 : i32
    %1 = arith.addi %0, %arg1 : i32
    %c0_i32 = arith.constant 0 : i32
    %c0_i32_0 = arith.constant 0 : i32
    return %1, %c0_i32 : i32, i32
  }
  func.func @transform_1(%arg0: i32, %arg1: i32) -> (i32, i32, i32) {
    %c0_i32 = arith.constant 0 : i32
    %c0_i32_0 = arith.constant 0 : i32
    %c0_i32_1 = arith.constant 0 : i32
    return %arg0, %c0_i32, %c0_i32_0 : i32, i32, i32
  }
}

</mosaic_0001>

<llo_original>
// kernel: grad_loss.1
$region0: #{grad_loss.1}
  #allocation0 [shape = 'u32[]', space=smem, size = 0x4, offset = 0x4, fixed_abs, tag = 'smem constant byte address 0x4 - core index']
  #allocation1 [shape = 'u32[144,128]{1,0:T(1,128)}', space=vmem, size = 0x12000, scoped, tag = 'internal scratch']
  %s0 = inlined_call_operand.vmem [shape: f32[16,128], index: 0, kind: input, shape index: {}]
  %s1 = inlined_call_operand.vmem [shape: f32[2,1,128], index: 1, kind: output, shape index: {}]
  %s2 = sld [smem:[#allocation0]]
  $region41: #{grad_loss.1} parent=0
    _
  %s4 = ssub.s32 1, %s2
  %s5 = scalar_select 0, %s4, %s2
  loop: start=0, step=1, limit=4
  $region2: #{grad_loss.1} parent=0 // loop_pre_header
    _
  $region3: #{grad_loss.1} parent=0 // loop_header
    %s7 = sphi 0, %s11
    %p8 = scmp.ge.s32.totalorder %s7, 4
    %s14 = sphi 0, %s26
    %s15 = sphi 0, %s22
    %s16 = sphi 0, %s14
    %s17 = sphi 0, %s15
    %s18 = sphi 0, %s16
    %s19 = sphi 0, %s17
    %s31 = sphi 0, %s33
    %s34 = sphi 0, %s31
    %s35 = sphi 0, %s34
    %s51 = sphi 0, %s35
    %s57 = sphi 0, %s59
    %s60 = sphi 0, %s57
    %s61 = sphi 0, %s60
    %s77 = sphi 0, %s61
  $region4: #{grad_loss.1} parent=0 // loop_header_branch
    %10 = sbr.rel (%p8) target = $region8
  $region5: #{grad_loss.1} parent=0 // loop_body
    %s12 = ssub.s32 %s7, 1
    %s13 = ssub.s32 %s7, 2
    %s20 = sadd.s32 1, %s15
    %p21 = scmp.ge.s32.totalorder %s20, 1
    %s22 = scalar_select %p21, 0, %s20
    %s23 = sadd.s32 1, %s14
    %s24 = scalar_select %p21, %s23, %s14
    %p25 = scmp.ge.s32.totalorder %s24, 2
    %s26 = scalar_select %p25, 0, %s24
    %s27 = sadd.s32 %s14, %s15
    %s28 = sadd.s32 %s26, %s22
    %s29 = ssub.s32 %s27, %s28
    %p30 = scmp.eq.s32.totalorder %s29, 0
    %s32 = sadd.s32 %s31, 1
    %s33 = scalar_select %p30, %s31, %s32
    %p36 = pneg %p30
    %p37 = scmp.eq.s32.totalorder %s7, 1
    %p38 = por %p36, %p37
    %p39 = scmp.ne.s32.totalorder %s31, %s34
    %p40 = scmp.eq.s32.totalorder %s7, 0
    %p41 = por %p39, %p40
    %p42 = scmp.ne.s32.totalorder %s31, %s34
    %p43 = scmp.eq.s32.totalorder %s12, 1
    %p44 = por %p42, %p43
    %p45 = scmp.ne.s32.totalorder %s34, %s35
    %p46 = scmp.eq.s32.totalorder %s12, 0
    %p47 = por %p45, %p46
    %p48 = scmp.ne.s32.totalorder %s34, %s35
    %p49 = scmp.eq.s32.totalorder %s13, 1
    %p50 = por %p48, %p49
    %p52 = scmp.ne.s32.totalorder %s35, %s51
    %p53 = scmp.eq.s32.totalorder %s13, 0
    %p54 = por %p52, %p53
    %s55 = ssub.s32 %s14, %s26
    %p56 = scmp.eq.s32.totalorder %s55, 0
    %s58 = sadd.s32 %s57, 1
    %s59 = scalar_select %p56, %s57, %s58
    %p62 = pneg %p56
    %p63 = scmp.eq.s32.totalorder %s7, 1
    %p64 = por %p62, %p63
    %p65 = scmp.ne.s32.totalorder %s57, %s60
    %p66 = scmp.eq.s32.totalorder %s7, 0
    %p67 = por %p65, %p66
    %p68 = scmp.ne.s32.totalorder %s57, %s60
    %p69 = scmp.eq.s32.totalorder %s12, 1
    %p70 = por %p68, %p69
    %p71 = scmp.ne.s32.totalorder %s60, %s61
    %p72 = scmp.eq.s32.totalorder %s12, 0
    %p73 = por %p71, %p72
    %p74 = scmp.ne.s32.totalorder %s60, %s61
    %p75 = scmp.eq.s32.totalorder %s13, 1
    %p76 = por %p74, %p75
    %p78 = scmp.ne.s32.totalorder %s61, %s77
    %p79 = scmp.eq.s32.totalorder %s13, 0
    %p80 = por %p78, %p79
    %p81 = scmp.le.s32.totalorder 1, %s7
    %p82 = scmp.lt.s32.totalorder %s7, 3
    %p83 = pnand %p81, %p82
    %p84 = pneg %p83
    // Predicated region
    $region9: #{grad_loss.1} parent=5 // pred_check
      _
    $region10: #{grad_loss.1} parent=5 // pred_check_branch
      %86 = sbr.rel (%p83) target = $region12
    $region11: #{grad_loss.1} parent=5 // pred_region
      %s87 = ssub.s32 %s7, 1
    $region12: #{grad_loss.1} parent=5 // pred_fallthru
      _
    %p88 = scmp.lt.s32.totalorder %s7, 2
    // Predicated region
    $region13: #{grad_loss.1} parent=5 // pred_check
      %p89 = pneg %p88
    $region14: #{grad_loss.1} parent=5 // pred_check_branch
      %91 = sbr.rel (%p89) target = $region16
    $region15: #{grad_loss.1} parent=5 // pred_region
      // Predicated region
      $region17: #{grad_loss.1} parent=15 // pred_check
        %p92 = pneg %p41
      $region18: #{grad_loss.1} parent=15 // pred_check_branch
        %94 = sbr.rel (%p92) target = $region20
      $region19: #{grad_loss.1} parent=15 // pred_region
        %s95 = sadd.s32 %s14, %s15
        %p96 = scmp.lt.s32.totalorder %s95, 1
        %s97 = scalar_select %p96, %s95, 1
        %s98 = smul.addr %s97, 8
        %s99 = scalar_lea.vmem %s0, %s98
        %s100 = sadd.s32 %s14, %s15
      $region20: #{grad_loss.1} parent=15 // pred_fallthru
        _
    $region16: #{grad_loss.1} parent=5 // pred_fallthru
      _
    %p101 = scmp.le.s32.totalorder 1, %s7
    %p102 = scmp.lt.s32.totalorder %s7, 3
    %p103 = pnand %p101, %p102
    %p104 = pneg %p103
    // Predicated region
    $region21: #{grad_loss.1} parent=5 // pred_check
      _
    $region22: #{grad_loss.1} parent=5 // pred_check_branch
      %106 = sbr.rel (%p103) target = $region24
    $region23: #{grad_loss.1} parent=5 // pred_region
      %s107 = ssub.s32 %s7, 1
      %s108 = sadd.s32 %s16, %s17
      %p109 = scmp.lt.s32.totalorder %s108, 1
      %s110 = scalar_select %p109, %s108, 1
      %s111 = smul.addr %s110, 8
      %s112 = scalar_lea.vmem %s0, %s111
      %p113 = pneg %p47
      %p114 = pneg %p44
      %p115 = pneg %p73
      %p116 = pneg %p70
      %p117 = scmp.lt.s32.totalorder %s16, 1
      %s118 = scalar_select %p117, %s16, 1
      %s119 = scalar_lea.vmem %s1, %s118
      %s120 = sadd.s32 %s16, %s17
      %p121 = scmp.lt.s32.totalorder %s120, 1
      %s122 = scalar_select %p121, %s120, 1
      %s123 = smul.addr %s122, 8
      %s124 = scalar_lea.vmem %s0, %s123
      %s125 = sadd.s32 %s16, %s17
      %p126 = scmp.lt.s32.totalorder %s16, 1
      %s127 = scalar_select %p126, %s16, 1
      %s128 = scalar_lea.vmem %s1, %s127
      %p129 = scmp.eq.s32.totalorder %s17, 0
      // Predicated region
      $region25: #{grad_loss.1} parent=23 // pred_check
        %p130 = pneg %p129
      $region26: #{grad_loss.1} parent=23 // pred_check_branch
        %132 = sbr.rel (%p130) target = $region28
      $region27: #{grad_loss.1} parent=23 // pred_region
        %133 = vst [vmem:[%s128] sm:$0x1] 0.0
      $region28: #{grad_loss.1} parent=23 // pred_fallthru
        _
      %v134 = vld [vmem:[%s124] sm:$0xff]
      %v135 = vlaneseq
      %v136 = vand.u32 %v135, 127
      %v137 = vlaneseq
      %v138 = vshrl.u32 %v137, 7
      %139 = vrot.lane.b32.xlu0 %v134, 127
      %v140 = vpop.permute.xlu0 %139
      %v141 = vsub.f32 %v140, %v134
      %v142 = vand.u32 2147483647, %v141
      %vm143 = vcmp.lt.s32.totalorder %v136, 0
      %v144 = vsub.s32 0, %v136
      %v145 = vsel %vm143, %v144, %v136
      %v146 = vshrl.u32 %v145, 4
      %v147 = vand.u32 %v145, 15
      %v148 = vsub.s32 0, %v147
      %v149 = vsel %vm143, %v148, %v147
      %vm150 = vcmp.ne.s32.totalorder %v149, 0
      %vm151 = vcmp.lt.s32.totalorder %v149, 0
      %vm152 = vmand %vm151, %vm150
      %v153 = vadd.s32 %v149, 16
      %v154 = vsel %vm152, %v153, %v149
      %vm155 = vcmp.ne.s32.totalorder %v154, 15
      %v156 = vsel %vm155, 0.00052083336, 0.0
      %v157 = vmul.f32 %v142, %v156
      %v158 = vrot.slane %v134, 1
      %vm159 = vcmp.lt.s32.totalorder %v136, 16
      %v160 = vsel %vm159, 1, 0
      %vm161 = vcmp.eq.s32.totalorder %v160, 1
      %v162 = vsel %vm161, %v158, %v134
      %163 = vrot.lane.b32.xlu0 %v162, 112
      %v164 = vpop.permute.xlu0 %163
      %v165 = vsub.f32 %v164, %v134
      %v166 = vand.u32 2147483647, %v165
      %vm167 = vcmp.lt.s32.totalorder %v138, 0
      %v168 = vsub.s32 0, %v138
      %v169 = vsel %vm167, %v168, %v138
      %v170 = vshrl.u32 %v169, 1
      %v171 = vand.u32 %v169, 1
      %v172 = vsub.s32 0, %v171
      %v173 = vsel %vm167, %v172, %v171
      %vm174 = vcmp.ne.s32.totalorder %v173, 0
      %vm175 = vcmp.lt.s32.totalorder %v173, 0
      %vm176 = vmand %vm175, %vm174
      %v177 = vadd.s32 %v173, 2
      %v178 = vsel %vm176, %v177, %v173
      %vm179 = vcmp.eq.s32.totalorder %v178, 1
      %vm180 = vcmp.ge.s32.totalorder %v136, 112
      %v181 = vsel %vm179, 1, 0
      %vm182 = vcmp.eq.s32.totalorder %v181, 1
      %v183 = vsel %vm180, 1, 0
      %vm184 = vcmp.eq.s32.totalorder %v183, 1
      %vm185 = vmand %vm182, %vm184
      %v186 = vsel %vm185, 0.0, 0.00052083336
      %v187 = vmul.f32 %v166, %v186
      %v188 = vadd.f32 %v157, %v187
      %v189 = vld [vmem:[%s128] sm:$0x1]
      %v190 = vrot.slane %v188, 4
      %v191 = vadd.f32 %v188, %v190
      %v192 = vrot.slane %v191, 2
      %v193 = vadd.f32 %v191, %v192
      %v194 = vrot.slane %v193, 1
      %v195 = vadd.f32 %v193, %v194
      %v196 = vadd.f32 %v189, %v195
      %197 = vst [vmem:[%s128] sm:$0x1] %v196
      %p198 = scmp.lt.s32.totalorder %s16, 1
      %s199 = scalar_select %p198, %s16, 1
      %s200 = scalar_lea.vmem %s1, %s199
      // Predicated region
      $region29: #{grad_loss.1} parent=23 // pred_check
        %p201 = pneg %p70
      $region30: #{grad_loss.1} parent=23 // pred_check_branch
        %203 = sbr.rel (%p201) target = $region32
      $region31: #{grad_loss.1} parent=23 // pred_region
        _
      $region32: #{grad_loss.1} parent=23 // pred_fallthru
        _
    $region24: #{grad_loss.1} parent=5 // pred_fallthru
      _
    %p204 = scmp.le.s32.totalorder 2, %s7
    // Predicated region
    $region33: #{grad_loss.1} parent=5 // pred_check
      %p205 = pneg %p204
    $region34: #{grad_loss.1} parent=5 // pred_check_branch
      %207 = sbr.rel (%p205) target = $region36
    $region35: #{grad_loss.1} parent=5 // pred_region
      %s208 = ssub.s32 %s7, 2
      // Predicated region
      $region37: #{grad_loss.1} parent=35 // pred_check
        %p209 = pneg %p76
      $region38: #{grad_loss.1} parent=35 // pred_check_branch
        %211 = sbr.rel (%p209) target = $region40
      $region39: #{grad_loss.1} parent=35 // pred_region
        %p212 = scmp.lt.s32.totalorder %s18, 1
        %s213 = scalar_select %p212, %s18, 1
        %s214 = scalar_lea.vmem %s1, %s213
      $region40: #{grad_loss.1} parent=35 // pred_fallthru
        _
    $region36: #{grad_loss.1} parent=5 // pred_fallthru
      _
  $region6: #{grad_loss.1} parent=0 // loop_footer
    %s11 = sadd.s32 1, %s7
  $region7: #{grad_loss.1} parent=0 // loop_footer_branch
    %6 = sbr.rel target = $region3
  $region8: #{grad_loss.1} parent=0 // loop_exit
    _

</llo_original>
